<compile_context>
chip_gen: v5e
topology: v5e:2x2
jax: 0.10.0
libtpu: 0.0.40
codegen_flags: <defaults>
</compile_context>

<pallas_src>
import math

import jax
import jax.numpy as jnp
from jax.experimental import pallas as pl
from jax.experimental.pallas import tpu as pltpu

_LOG_SQRT_628 = math.log(math.sqrt(6.28))
_LANE = 128
_MAX_BLOCK_ELEMS = 1 << 20        # cap per full stream per block (~4 MiB in f32)
_MIN_GRID_STEPS = 4               # keep several grid steps for pipelining / v7x megacore


def _lcm(a, b):
    return a * b // math.gcd(a, b)


def _vmem_capacity_bytes():
    try:
        return int(pltpu.get_tpu_info().vmem_capacity_bytes)
    except Exception:
        return 64 << 20           # conservative default (v7x per-TC VMEM)


def _make_kernel(has_cw, has_sigma, has_weights, C, G):
    ncols = G * C

    def kernel(*refs):
        i = 0
        x_ref = refs[i]; i += 1
        t_ref = refs[i]; i += 1
        s_ref = None
        if has_sigma:
            s_ref = refs[i]; i += 1
        w_ref = None
        if has_weights:
            w_ref = refs[i]; i += 1
        cw_ref = None
        if has_cw:
            cw_ref = refs[i]; i += 1
        o_ref = refs[i]

        x = x_ref[...].astype(jnp.float32)
        t = t_ref[...].astype(jnp.float32)
        # target = where(isnan(target), input, target)
        t = jnp.where(jnp.isnan(t), x, t)
        diff = x - t
        if has_cw:
            diff = diff * cw_ref[...].astype(jnp.float32)    # (1, ncols) bcast over rows
        if has_sigma:
            s = s_ref[...].astype(jnp.float32)
            d = diff * jnp.exp(-s)                           # == diff / exp(sigma)
            loss = 0.5 * (d * d) + (s + _LOG_SQRT_628)
        else:
            loss = 0.5 * (diff * diff)
        if has_weights:
            w = w_ref[...].astype(jnp.float32)               # (rows, G): one weight per C lanes
            if C == 1 or G == 1:
                # shapes are already broadcastable: (rows, ncols) or (rows, 1)
                loss = loss * w
            else:
                # Expand (rows, G) -> (rows, G*C) on the (idle) MXU:
                #   w_full[r, j] = w[r, j // C]
                g_idx = jax.lax.broadcasted_iota(jnp.int32, (G, ncols), 0)
                j_idx = jax.lax.broadcasted_iota(jnp.int32, (G, ncols), 1)
                expand = ((j_idx >= g_idx * C) &
                          (j_idx < (g_idx + 1) * C)).astype(jnp.float32)
                loss = loss * jnp.dot(w, expand, preferred_element_type=jnp.float32)
        o_ref[...] = loss.astype(o_ref.dtype)

    return kernel


class WeightedL2WithSigmaLoss:
    """JAX/Pallas port of the PyTorch module (forward pass only)."""

    def __init__(self, code_weights=None):
        if code_weights is not None:
            self.code_weights = jnp.asarray(code_weights, dtype=jnp.float32)
        else:
            self.code_weights = None

    def __call__(self, input, target, weights=None, sigma=None):
        x = jnp.asarray(input)
        t = jnp.asarray(target)
        shape = x.shape
        C = int(shape[-1])
        total = math.prod(shape)
        out_dtype = jnp.result_type(x.dtype, t.dtype)

        has_cw = self.code_weights is not None
        has_sigma = sigma is not None
        has_weights = weights is not None

        if has_cw:
            assert self.code_weights.shape == (C,)
        if has_sigma:
            s = jnp.asarray(sigma)
            assert s.shape == shape
        if has_weights:
            w = jnp.asarray(weights)
            assert w.shape == shape[:-1]

        # ---- dense, lane-aligned 2-D layout ---------------------------------
        # Row width is a multiple of 128 (lane-dense) and of C (so per-vector
        # weights / code_weights line up identically in every block).
        ncols = _lcm(_LANE, C)
        G = ncols // C                       # code-vectors per data row (divides 128)
        nrows = -(-total // ncols)
        padded_total = nrows * ncols

        def pad_flat(a, n):
            flat = a.reshape(-1)
            if flat.shape[0] != n:
                flat = jnp.pad(flat, (0, n - flat.shape[0]))
            return flat

        x2d = pad_flat(x, padded_total).reshape(nrows, ncols)
        t2d = pad_flat(t, padded_total).reshape(nrows, ncols)

        operands = [x2d, t2d]
        itemsizes = [x2d.dtype.itemsize, t2d.dtype.itemsize,
                     jnp.dtype(out_dtype).itemsize]
        per_row_bytes = ncols * (x2d.dtype.itemsize + t2d.dtype.itemsize
                                 + jnp.dtype(out_dtype).itemsize)
        if has_sigma:
            s2d = pad_flat(s, padded_total).reshape(nrows, ncols)
            operands.append(s2d)
            itemsizes.append(s2d.dtype.itemsize)
            per_row_bytes += ncols * s2d.dtype.itemsize
        if has_weights:
            # Compact weights stream: one scalar per code vector, no HBM broadcast.
            w2d = pad_flat(w, nrows * G).reshape(nrows, G)
            operands.append(w2d)
            itemsizes.append(w2d.dtype.itemsize)
            per_row_bytes += G * w2d.dtype.itemsize
        if has_cw:
            cw2d = jnp.tile(self.code_weights, G).reshape(1, ncols)
            operands.append(cw2d)
            itemsizes.append(cw2d.dtype.itemsize)

        row_align = 32 // min(itemsizes)     # 8 for f32 tiles, 16 for bf16, ...

        # ---- generation-aware block sizing ----------------------------------
        vmem_cap = _vmem_capacity_bytes()
        vmem_limit = min(vmem_cap // 2, 64 << 20)
        # Half the scoped limit for double-buffered I/O blocks, half kept free
        # for in-kernel f32 temporaries / compiler scratch.
        block_budget = vmem_limit // 2
        rows_by_vmem = (block_budget // (2 * per_row_bytes)) // row_align * row_align
        rows_by_cap = (_MAX_BLOCK_ELEMS // ncols) // row_align * row_align
        block_rows = max(row_align, min(rows_by_vmem, rows_by_cap))
        if nrows >= _MIN_GRID_STEPS * row_align:
            # Keep the grid split into several steps (pipelining + both v7x TCs).
            split_cap = max(row_align,
                            (nrows // _MIN_GRID_STEPS) // row_align * row_align)
            block_rows = min(block_rows, split_cap)
        block_rows = min(block_rows, nrows)
        # TODO(synk): for pathological C where even an 8-row block of lcm(128, C)
        # columns exceeds the VMEM budget, column tiling of ncols would be needed.

        grid = (pl.cdiv(nrows, block_rows),)
        data_spec = pl.BlockSpec((block_rows, ncols), lambda i: (i, 0))

        in_specs = [data_spec, data_spec]
        if has_sigma:
            in_specs.append(data_spec)
        if has_weights:
            in_specs.append(pl.BlockSpec((block_rows, G), lambda i: (i, 0)))
        if has_cw:
            in_specs.append(pl.BlockSpec((1, ncols), lambda i: (0, 0)))

        out_nbytes = padded_total * jnp.dtype(out_dtype).itemsize
        cost = pl.CostEstimate(
            flops=(8 + (2 * G if has_weights else 0)) * padded_total,
            transcendentals=padded_total if has_sigma else 0,
            bytes_accessed=sum(int(op.size) * op.dtype.itemsize for op in operands)
            + out_nbytes,
        )

        out2d = pl.pallas_call(
            _make_kernel(has_cw, has_sigma, has_weights, C, G),
            out_shape=jax.ShapeDtypeStruct((nrows, ncols), out_dtype),
            grid=grid,
            in_specs=in_specs,
            out_specs=data_spec,
            compiler_params=pltpu.CompilerParams(
                dimension_semantics=("parallel",),
                vmem_limit_bytes=int(vmem_limit),
            ),
            cost_estimate=cost,
        )(*operands)

        out_flat = out2d.reshape(-1)
        if padded_total != total:
            out_flat = out_flat[:total]
        return out_flat.reshape(shape)


def _reference(input, target, code_weights, weights, sigma):
    x = jnp.asarray(input, jnp.float32)
    t = jnp.asarray(target, jnp.float32)
    t = jnp.where(jnp.isnan(t), x, t)
    diff = x - t
    if code_weights is not None:
        diff = diff * code_weights
    if sigma is None:
        loss = 0.5 * diff ** 2
    else:
        s = jnp.asarray(sigma, jnp.float32)
        loss = 0.5 * (diff / jnp.exp(s)) ** 2 + _LOG_SQRT_628 + s
    if weights is not None:
        loss = loss * jnp.asarray(weights, jnp.float32)[..., None]
    return loss


if __name__ == "__main__":
    B, N, C = 2, 16, 8
    key = jax.random.PRNGKey(0)
    k1, k2, k3, k4 = jax.random.split(key, 4)

    x = jax.random.normal(k1, (B, N, C), jnp.float32)
    t = jax.random.normal(k2, (B, N, C), jnp.float32)
    # inject some NaNs in the target to exercise the isnan path
    t = t.at[0, 3, 2].set(jnp.nan).at[1, 7, 5].set(jnp.nan)
    w = jax.random.uniform(k3, (B, N), jnp.float32)
    s = 0.1 * jax.random.normal(k4, (B, N, C), jnp.float32)

    code_weights = [1.0, 0.5, 2.0, 1.5, 0.25, 3.0, 0.75, 1.25]
    cw_arr = jnp.asarray(code_weights, jnp.float32)
    module = WeightedL2WithSigmaLoss(code_weights=code_weights)

    # 1) full path: code_weights + compact weights + sigma (dense layout)
    out = jax.block_until_ready(module(x, t, weights=w, sigma=s))
    ref = _reference(x, t, cw_arr, w, s)
    assert out.shape == (B, N, C) and out.dtype == jnp.float32
    assert jnp.allclose(out, ref, atol=1e-5, rtol=1e-5)

    # 2) sigma=None / weights=None (dead streams are never built nor DMA'd)
    out2 = jax.block_until_ready(module(x, t))
    ref2 = _reference(x, t, cw_arr, None, None)
    assert jnp.allclose(out2, ref2, atol=1e-5, rtol=1e-5)

    # 3) no code_weights
    module_plain = WeightedL2WithSigmaLoss()
    out3 = jax.block_until_ready(module_plain(x, t, weights=w, sigma=s))
    ref3 = _reference(x, t, None, w, s)
    assert jnp.allclose(out3, ref3, atol=1e-5, rtol=1e-5)

    # 4) element count not divisible by 128 -> pad-to-dense path
    xf, tf, wf, sf = x[:, :15, :], t[:, :15, :], w[:, :15], s[:, :15, :]
    out4 = jax.block_until_ready(module(xf, tf, weights=wf, sigma=sf))
    ref4 = _reference(xf, tf, cw_arr, wf, sf)
    assert out4.shape == xf.shape
    assert jnp.allclose(out4, ref4, atol=1e-5, rtol=1e-5)

    # 5) native bf16 streams (upcast to f32 happens in-register inside the kernel)
    xb, tb, sb = x.astype(jnp.bfloat16), t.astype(jnp.bfloat16), s.astype(jnp.bfloat16)
    wb = w.astype(jnp.bfloat16)
    out5 = jax.block_until_ready(module(xb, tb, weights=wb, sigma=sb))
    ref5 = _reference(xb, tb, cw_arr, wb, sb).astype(jnp.bfloat16)
    assert out5.dtype == jnp.bfloat16
    assert jnp.allclose(out5.astype(jnp.float32), ref5.astype(jnp.float32),
                        atol=2e-2, rtol=2e-2)

    print("KERNEL_OK")
</pallas_src>

<mosaic_0001>
module attributes {stable_mosaic.version = 11 : i64} {
  func.func @kernel(%arg0: i32, %arg1: memref<2x128xf32, #tpu.memory_space<vmem>>, %arg2: memref<2x128xf32, #tpu.memory_space<vmem>>, %arg3: memref<2x128xf32, #tpu.memory_space<vmem>>, %arg4: memref<2x16xf32, #tpu.memory_space<vmem>>, %arg5: memref<1x128xf32, #tpu.memory_space<vmem>>, %arg6: memref<2x128xf32, #tpu.memory_space<vmem>>) attributes {dimension_semantics = [#tpu.dimension_semantics<parallel>], iteration_bounds = array<i64: 1>, scalar_prefetch = 0 : i64, scratch_operands = 0 : i64, tpu.core_type = #tpu.core_type<tc>, window_params = [{transform_indices = @transform_0, window_bounds = array<i64: 2, 128>}, {transform_indices = @transform_1, window_bounds = array<i64: 2, 128>}, {transform_indices = @transform_2, window_bounds = array<i64: 2, 128>}, {transform_indices = @transform_3, window_bounds = array<i64: 2, 16>}, {pipeline_mode = #tpu.pipeline_mode<synchronous>, transform_indices = @transform_4, window_bounds = array<i64: 1, 128>}, {transform_indices = @transform_5, window_bounds = array<i64: 2, 128>}]} {
    %c0 = arith.constant 0 : index
    %c0_0 = arith.constant 0 : index
    %0 = vector.load %arg1[%c0, %c0_0] : memref<2x128xf32, #tpu.memory_space<vmem>>, vector<2x128xf32>
    %c0_1 = arith.constant 0 : index
    %c0_2 = arith.constant 0 : index
    %1 = vector.load %arg2[%c0_1, %c0_2] : memref<2x128xf32, #tpu.memory_space<vmem>>, vector<2x128xf32>
    %2 = arith.cmpf one, %1, %1 : vector<2x128xf32>
    %3 = arith.select %2, %0, %1 : vector<2x128xi1>, vector<2x128xf32>
    %4 = arith.subf %0, %3 : vector<2x128xf32>
    %c0_3 = arith.constant 0 : index
    %c0_4 = arith.constant 0 : index
    %5 = vector.load %arg5[%c0_3, %c0_4] : memref<1x128xf32, #tpu.memory_space<vmem>>, vector<1x128xf32>
    %6 = vector.broadcast %5 : vector<1x128xf32> to vector<2x128xf32>
    %7 = arith.mulf %4, %6 : vector<2x128xf32>
    %c0_5 = arith.constant 0 : index
    %c0_6 = arith.constant 0 : index
    %8 = vector.load %arg3[%c0_5, %c0_6] : memref<2x128xf32, #tpu.memory_space<vmem>>, vector<2x128xf32>
    %cst = arith.constant 0.000000e+00 : f32
    %9 = vector.broadcast %cst : f32 to vector<2x128xf32>
    %10 = arith.subf %9, %8 : vector<2x128xf32>
    %11 = math.exp %10 : vector<2x128xf32>
    %12 = arith.mulf %7, %11 : vector<2x128xf32>
    %13 = arith.mulf %12, %12 : vector<2x128xf32>
    %cst_7 = arith.constant 5.000000e-01 : f32
    %14 = vector.broadcast %cst_7 : f32 to vector<2x128xf32>
    %15 = arith.mulf %14, %13 : vector<2x128xf32>
    %cst_8 = arith.constant 9.186850e-01 : f32
    %16 = vector.broadcast %cst_8 : f32 to vector<2x128xf32>
    %17 = arith.addf %8, %16 : vector<2x128xf32>
    %18 = arith.addf %15, %17 : vector<2x128xf32>
    %c0_9 = arith.constant 0 : index
    %c0_10 = arith.constant 0 : index
    %19 = vector.load %arg4[%c0_9, %c0_10] : memref<2x16xf32, #tpu.memory_space<vmem>>, vector<2x16xf32>
    %20 = tpu.iota {dimensions = array<i32: 0>} : vector<16x128xi32>
    %21 = tpu.iota {dimensions = array<i32: 1>} : vector<16x128xi32>
    %c8_i32 = arith.constant 8 : i32
    %22 = vector.broadcast %c8_i32 : i32 to vector<16x128xi32>
    %23 = arith.muli %20, %22 : vector<16x128xi32>
    %24 = arith.cmpi sge, %21, %23 : vector<16x128xi32>
    %c1_i32 = arith.constant 1 : i32
    %25 = vector.broadcast %c1_i32 : i32 to vector<16x128xi32>
    %26 = arith.addi %20, %25 : vector<16x128xi32>
    %c8_i32_11 = arith.constant 8 : i32
    %27 = vector.broadcast %c8_i32_11 : i32 to vector<16x128xi32>
    %28 = arith.muli %26, %27 : vector<16x128xi32>
    %29 = arith.cmpi slt, %21, %28 : vector<16x128xi32>
    %30 = arith.andi %24, %29 : vector<16x128xi1>
    %31 = arith.extui %30 : vector<16x128xi1> to vector<16x128xi32>
    %32 = arith.sitofp %31 : vector<16x128xi32> to vector<16x128xf32>
    %cst_12 = arith.constant dense<0.000000e+00> : vector<2x128xf32>
    %33 = tpu.matmul %19, %32, %cst_12 {dimension_numbers = #tpu.dot_dimension_numbers<[1], [0], [0], [1], [0, 0, 1, 1], [], []>} : vector<2x16xf32>, vector<16x128xf32>, vector<2x128xf32> -> vector<2x128xf32>
    %34 = arith.mulf %18, %33 : vector<2x128xf32>
    %c0_13 = arith.constant 0 : index
    %c0_14 = arith.constant 0 : index
    %35 = vector.load %arg6[%c0_13, %c0_14] : memref<2x128xf32, #tpu.memory_space<vmem>>, vector<2x128xf32>
    tpu.vector_store %arg6[%c0_13, %c0_14], %34 {strides = array<i32>} : memref<2x128xf32, #tpu.memory_space<vmem>>, vector<2x128xf32>,
    return
  }
  func.func @transform_0(%arg0: i32) -> (i32, i32) {
    %c0_i32 = arith.constant 0 : i32
    %c0_i32_0 = arith.constant 0 : i32
    return %arg0, %c0_i32 : i32, i32
  }
  func.func @transform_1(%arg0: i32) -> (i32, i32) {
    %c0_i32 = arith.constant 0 : i32
    %c0_i32_0 = arith.constant 0 : i32
    return %arg0, %c0_i32 : i32, i32
  }
  func.func @transform_2(%arg0: i32) -> (i32, i32) {
    %c0_i32 = arith.constant 0 : i32
    %c0_i32_0 = arith.constant 0 : i32
    return %arg0, %c0_i32 : i32, i32
  }
  func.func @transform_3(%arg0: i32) -> (i32, i32) {
    %c0_i32 = arith.constant 0 : i32
    %c0_i32_0 = arith.constant 0 : i32
    return %arg0, %c0_i32 : i32, i32
  }
  func.func @transform_4(%arg0: i32) -> (i32, i32) {
    %c0_i32 = arith.constant 0 : i32
    %c0_i32_0 = arith.constant 0 : i32
    %c0_i32_1 = arith.constant 0 : i32
    return %c0_i32, %c0_i32_0 : i32, i32
  }
  func.func @transform_5(%arg0: i32) -> (i32, i32) {
    %c0_i32 = arith.constant 0 : i32
    %c0_i32_0 = arith.constant 0 : i32
    return %arg0, %c0_i32 : i32, i32
  }
}

</mosaic_0001>

<llo_original>
// kernel: tpu_custom_call.1
$region0: #{tpu_custom_call.1}
  #allocation0 [shape = 'u32[]', space=smem, size = 0x4, offset = 0x4, fixed_abs, tag = 'smem constant byte address 0x4 - core index']
  #allocation1 [shape = 'u32[72,128]{1,0:T(1,128)}', space=vmem, size = 0x9000, scoped, tag = 'internal scratch']
  %s0 = inlined_call_operand.hbm [shape: f32[2,128], index: 0, kind: input, shape index: {}]
  %s1 = inlined_call_operand.hbm [shape: f32[2,128], index: 1, kind: input, shape index: {}]
  %s2 = inlined_call_operand.hbm [shape: f32[2,128], index: 2, kind: input, shape index: {}]
  %s3 = inlined_call_operand.vmem [shape: f32[2,16], index: 3, kind: input, shape index: {}]
  %s4 = inlined_call_operand.vmem [shape: f32[1,128], index: 4, kind: input, shape index: {}]
  %s5 = inlined_call_operand.hbm [shape: f32[2,128], index: 5, kind: output, shape index: {}]
  %s6 = sld [smem:[#allocation0]]
  $region42: #{tpu_custom_call.1} parent=0
    _
  %s8 = ssub.s32 1, %s6
  %s9 = scalar_select 0, %s8, %s6
  $region1: #{tpu_custom_call.1} parent=0
    #allocation2 [shape = 'u8[1024]{0}', space=vmem, size = 0x400, scoped, tag = 'input window, operand 0, single buffered']
    #allocation3 [shape = 's32[1]{0}', space=sflag, size = 0x4, scoped, tag = 'scoped memory for tpu_custom_call.1']
    #allocation4 [shape = 's32[1]{0}', space=sflag, size = 0x4, scoped, tag = 'scoped memory for tpu_custom_call.1']
    #allocation5 [shape = 'u8[1024]{0}', space=vmem, size = 0x400, scoped, tag = 'input window, operand 1, single buffered']
    #allocation6 [shape = 's32[1]{0}', space=sflag, size = 0x4, scoped, tag = 'scoped memory for tpu_custom_call.1']
    #allocation7 [shape = 'u8[1024]{0}', space=vmem, size = 0x400, scoped, tag = 'input window, operand 2, single buffered']
    #allocation8 [shape = 'u8[1024]{0}', space=vmem, size = 0x400, scoped, tag = 'output window, operand 0, single buffered']
    %10 = vsyncpa [#allocation3], 0
    %11 = vsyncpa [#allocation6], 0
    %12 = vsyncpa [#allocation4], 0
    // Predicated region
    $region2: #{tpu_custom_call.1} parent=1 // pred_check
      _
    $region3: #{tpu_custom_call.1} parent=1 // pred_check_branch
      %14 = sbr.rel (0) target = $region5
    $region4: #{tpu_custom_call.1} parent=1 // pred_region
      %16 = vsyncadd [#allocation3], 0
      %s18 = sshll.u32 %s0, 4
      %s19 = int_to_ptr.hbm [resolvable:$true] %s18
      %s20 = sshll.u32 [#allocation2], 4
      %s21 = int_to_ptr.vmem [resolvable:$true] %s20
      %23 = dma.hbm_to_vmem [thread:$0]  %s19, 32, %s21, [#allocation3]
    $region5: #{tpu_custom_call.1} parent=1 // pred_fallthru
      _
    // Predicated region
    $region6: #{tpu_custom_call.1} parent=1 // pred_check
      _
    $region7: #{tpu_custom_call.1} parent=1 // pred_check_branch
      %25 = sbr.rel (0) target = $region9
    $region8: #{tpu_custom_call.1} parent=1 // pred_region
      %27 = vsyncadd [#allocation6], 0
      %s29 = sshll.u32 %s1, 4
      %s30 = int_to_ptr.hbm [resolvable:$true] %s29
      %s31 = sshll.u32 [#allocation5], 4
      %s32 = int_to_ptr.vmem [resolvable:$true] %s31
      %34 = dma.hbm_to_vmem [thread:$0]  %s30, 32, %s32, [#allocation6]
    $region9: #{tpu_custom_call.1} parent=1 // pred_fallthru
      _
    // Predicated region
    $region10: #{tpu_custom_call.1} parent=1 // pred_check
      _
    $region11: #{tpu_custom_call.1} parent=1 // pred_check_branch
      %36 = sbr.rel (0) target = $region13
    $region12: #{tpu_custom_call.1} parent=1 // pred_region
      %38 = vsyncadd [#allocation6], 0
      %s40 = sshll.u32 %s2, 4
      %s41 = int_to_ptr.hbm [resolvable:$true] %s40
      %s42 = sshll.u32 [#allocation7], 4
      %s43 = int_to_ptr.vmem [resolvable:$true] %s42
      %45 = dma.hbm_to_vmem [thread:$0]  %s41, 32, %s43, [#allocation6]
    $region13: #{tpu_custom_call.1} parent=1 // pred_fallthru
      _
    // Predicated region
    $region14: #{tpu_custom_call.1} parent=1 // pred_check
      _
    $region15: #{tpu_custom_call.1} parent=1 // pred_check_branch
      %47 = sbr.rel (0) target = $region17
    $region16: #{tpu_custom_call.1} parent=1 // pred_region
      _
    $region17: #{tpu_custom_call.1} parent=1 // pred_fallthru
      _
    // Predicated region
    $region18: #{tpu_custom_call.1} parent=1 // pred_check
      _
    $region19: #{tpu_custom_call.1} parent=1 // pred_check_branch
      %49 = sbr.rel (0) target = $region21
    $region20: #{tpu_custom_call.1} parent=1 // pred_region
      _
    $region21: #{tpu_custom_call.1} parent=1 // pred_fallthru
      _
    // Predicated region
    $region22: #{tpu_custom_call.1} parent=1 // pred_check
      _
    $region23: #{tpu_custom_call.1} parent=1 // pred_check_branch
      %51 = sbr.rel (0) target = $region25
    $region24: #{tpu_custom_call.1} parent=1 // pred_region
      %53 = dma.done [#allocation3], 32
    $region25: #{tpu_custom_call.1} parent=1 // pred_fallthru
      _
    // Predicated region
    $region26: #{tpu_custom_call.1} parent=1 // pred_check
      _
    $region27: #{tpu_custom_call.1} parent=1 // pred_check_branch
      %55 = sbr.rel (0) target = $region29
    $region28: #{tpu_custom_call.1} parent=1 // pred_region
      %57 = dma.done [#allocation6], 32
    $region29: #{tpu_custom_call.1} parent=1 // pred_fallthru
      _
    // Predicated region
    $region30: #{tpu_custom_call.1} parent=1 // pred_check
      _
    $region31: #{tpu_custom_call.1} parent=1 // pred_check_branch
      %59 = sbr.rel (0) target = $region33
    $region32: #{tpu_custom_call.1} parent=1 // pred_region
      %61 = dma.done [#allocation6], 32
    $region33: #{tpu_custom_call.1} parent=1 // pred_fallthru
      _
    %v62 = vld [vmem:[#allocation2] sm:$0x3]
    %v63 = vld [vmem:[#allocation5] sm:$0x3]
    %vm64 = vcmp.ne.f32.partialorder %v63, %v63
    %v65 = vsel %vm64, %v62, %v63
    %v66 = vsub.f32 %v62, %v65
    %v67 = vld [vmem:[%s4] sm:$0x1]
    %v69 = vperm.slane %v67, 0
    %v71 = vmul.f32 %v66, %v69
    %v72 = vld [vmem:[#allocation7] sm:$0x3]
    %v73 = vsub.f32 0.0, %v72
    %v74 = vmul.f32 %v73, 1.442695
    %v75 = vpow.pop %v74
    %v76 = vmul.f32 %v71, %v75
    %v77 = vmul.f32 %v76, %v76
    %v78 = vmul.f32 %v77, 0.5
    %v79 = vadd.f32 %v72, 0.918685
    %v80 = vadd.f32 %v78, %v79
    %v81 = vld [vmem:[%s3] sm:$0x3]
    %v82 = vlaneseq
    %v83 = vshrl.u32 %v82, 7
    %v84 = vadd.s32 %v83, 8
    %v85 = vlaneseq
    %v86 = vand.u32 %v85, 127
    %v87 = vmul.u32 %v83, 8
    %v88 = vmul.u32 %v84, 8
    %vm89 = vcmp.ge.s32.totalorder %v86, %v87
    %vm90 = vcmp.ge.s32.totalorder %v86, %v88
    %v91 = vadd.s32 %v83, 1
    %v92 = vadd.s32 %v84, 1
    %v93 = vmul.u32 %v91, 8
    %v94 = vmul.u32 %v92, 8
    %vm95 = vcmp.lt.s32.totalorder %v86, %v93
    %vm96 = vcmp.lt.s32.totalorder %v86, %v94
    %vm97 = vmand %vm89, %vm95
    %vm98 = vmand %vm90, %vm96
    %v99 = vsel %vm97, 1, 0
    %v100 = vsel %vm98, 1, 0
    %v101 = vcvt.s32.f32 %v99
    %v102 = vcvt.s32.f32 %v100
    %vm103 = vcmask 130048
    %v105 = vsel %vm103, %v81, 0
    %107 = vmatpush.msra.mxu0 0.0
    %108 = vmatpush.msra.mxu0 0.0
    %109 = vmatpush.msra.mxu0 0.0
    %110 = vmatpush.msra.mxu0 0.0
    %111 = vmatpush.msra.mxu0 0.0
    %112 = vmatpush.msra.mxu0 0.0
    %113 = vmatpush.msra.mxu0 0.0
    %114 = vmatpush.msra.mxu0 0.0
    %115 = vmatpush.msra.mxu0 0.0
    %116 = vmatpush.msra.mxu0 0.0
    %117 = vmatpush.msra.mxu0 0.0
    %118 = vmatpush.msra.mxu0 0.0
    %119 = vmatpush.msra.mxu0 0.0
    %120 = vmatpush.msra.mxu0 0.0
    %121 = vmatpush.msra.mxu0 %v102
    %122 = vmatpush.msra.mxu0 %v101
    %123 = vmatmul.f32.gmra.mxu0 %v105
    %v124 = vpop.f32.mrf.mxu0
    %v125 = vadd.f32 0.0, %v124
    %126 = vdwg.mxu0
    %v127 = vmul.f32 %v80, %v125
    %128 = vst [vmem:[#allocation8] sm:$0x3] %v127
    // Predicated region
    $region34: #{tpu_custom_call.1} parent=1 // pred_check
      _
    $region35: #{tpu_custom_call.1} parent=1 // pred_check_branch
      %130 = sbr.rel (0) target = $region37
    $region36: #{tpu_custom_call.1} parent=1 // pred_region
      %132 = vsyncadd [#allocation4], 0
      %s134 = sshll.u32 [#allocation8], 4
      %s135 = int_to_ptr.vmem [resolvable:$true] %s134
      %s136 = sshll.u32 %s5, 4
      %s137 = int_to_ptr.hbm [resolvable:$true] %s136
      %139 = dma.vmem_to_hbm [thread:$0]  %s135, 32, %s137, [#allocation4]
    $region37: #{tpu_custom_call.1} parent=1 // pred_fallthru
      _
    // Predicated region
    $region38: #{tpu_custom_call.1} parent=1 // pred_check
      _
    $region39: #{tpu_custom_call.1} parent=1 // pred_check_branch
      %141 = sbr.rel (0) target = $region41
    $region40: #{tpu_custom_call.1} parent=1 // pred_region
      %143 = dma.done [#allocation4], 32
    $region41: #{tpu_custom_call.1} parent=1 // pred_fallthru
      _
    %144 = vsyncpa [#allocation3], 1
    %145 = vsyncpa [#allocation6], 1
    %146 = vsyncpa [#allocation4], 1

</llo_original>
